<compile_context>
chip_gen: v5e
topology: v5e:2x2
jax: 0.10.0
libtpu: 0.0.40
codegen_flags: <defaults>
</compile_context>

<pallas_src>
import functools

import jax
import jax.numpy as jnp
from jax import lax
from jax.experimental import pallas as pl
from jax.experimental.pallas import tpu as pltpu

_EPS = 1e-8


def _lm_hard_kernel(inp_ref, tgt_ref, msk_ref, base_ref, wp_ref, w_ref,
                    out_ref, gacc_ref, *, n_rows, tile_rows, tile_v):
    """Grid = (row tiles ["parallel"], vocab slices ["arbitrary"]).

    gacc_ref : VMEM (tile_rows, 1) f32 accumulator of the gathered log-prob.
    out_ref  : (1, 8, 128) f32 slab, written on the last vocab slice:
               lane 0: sum(loss_1 + loss_2)   lane 1: sum(loss_1)
               lane 2: sum(baseline * mask)   lane 3: sum(mask)
    """
    ri = pl.program_id(0)
    vi = pl.program_id(1)

    @pl.when(vi == 0)
    def _():
        gacc_ref[...] = jnp.zeros_like(gacc_ref)

    # ---- vocab-slice partial gather, in the input's native dtype ------------
    inp = inp_ref[...]                                    # (tile_rows, tile_v)
    tgt = tgt_ref[...]                                    # (tile_rows, 1) int32
    vocab_ids = lax.broadcasted_iota(jnp.int32, (1, tile_v), 1) + vi * tile_v
    hit = vocab_ids == tgt                                # broadcast compare
    zero = jnp.zeros((), dtype=inp.dtype)
    # Exact even in bf16: at most one non-zero term per row.
    partial = jnp.sum(jnp.where(hit, inp, zero), axis=1, keepdims=True)
    gacc_ref[...] += partial.astype(jnp.float32)

    # ---- finalize on the last vocab slice ------------------------------------
    @pl.when(vi == pl.num_programs(1) - 1)
    def _():
        row_ids = lax.broadcasted_iota(jnp.int32, (tile_rows, 1), 0) + ri * tile_rows
        valid = row_ids < n_rows                          # mask rows of a partial tile

        msk = jnp.where(valid, msk_ref[...].astype(jnp.float32), 0.0)
        base = jnp.where(valid, base_ref[...].astype(jnp.float32), 0.0)
        gathered = jnp.where(valid, gacc_ref[...], 0.0)

        wp = wp_ref[...]                                  # (tile_rows, K) native dtype
        w = w_ref[...]
        zk = jnp.zeros((), dtype=wp.dtype)
        wp_sel = jnp.sum(jnp.where(w > 0, wp, zk), axis=1, keepdims=True)
        wp_sel = jnp.where(valid, wp_sel.astype(jnp.float32), 1.0)

        loss_1 = gathered * msk
        coeff = loss_1 - base                             # detached in torch; same forward value
        loss_2 = coeff * jnp.log(wp_sel + _EPS) * msk

        s_out = jnp.sum(loss_1 + loss_2)
        s_l1 = jnp.sum(loss_1)
        s_bm = jnp.sum(base * msk)
        s_m = jnp.sum(msk)

        lane = lax.broadcasted_iota(jnp.int32, (8, 128), 1)
        slab = jnp.where(lane == 0, s_out,
               jnp.where(lane == 1, s_l1,
               jnp.where(lane == 2, s_bm,
               jnp.where(lane == 3, s_m, 0.0))))
        out_ref[0] = slab


def _auto_tiles(n_rows, vocab, in_itemsize):
    """Pick (tile_rows, tile_v) that are safe/fast on v5e / v6e / v7x."""
    # Vocab tile: full vocab when small, otherwise a 2048-lane strip (multiple
    # of 128; the last partial strip is handled by the iota compare).
    tile_v = vocab if vocab <= 2048 else 2048

    budget = 12 * 1024 * 1024           # per input pipeline buffer (x2 dbuf)
    rows_budget = max(16, (budget // (tile_v * in_itemsize)) // 16 * 16)
    rows_split = max(16, (n_rows // 4) // 16 * 16)   # >= 4 row tiles -> 2-TC sharding + pipelining
    tile_rows = min(rows_budget, rows_split, 1024)
    if tile_rows >= n_rows or n_rows < 64:
        tile_rows = n_rows              # single row tile == full dim (always legal)
    return tile_rows, tile_v


def language_model_criterion_hard(inp, target, mask, baseline, weight_p, weight,
                                  *, tile_rows=None, tile_v=None):
    """Pallas implementation of LanguageModelCriterion_hard.forward.

    Returns (output_scalar, new_baseline_(B,T)).
    """
    B, T, V = inp.shape
    K = weight_p.shape[-1]
    N = B * T

    target = target[:, :T].astype(jnp.int32)
    mask = mask[:, :T]

    same_size = tuple(baseline.shape) == (B, T)
    # If baseline has a different shape, coefficient == loss_1 == loss_1 - 0.
    base2d = baseline if same_size else jnp.zeros((B, T), jnp.float32)

    # Flatten (B, T) -> N rows: removes B-divisibility constraints and keeps
    # all DMAs fully contiguous.
    inp_f = inp.reshape(N, V)
    tgt_f = target.reshape(N, 1)
    msk_f = mask.reshape(N, 1)
    base_f = base2d.reshape(N, 1)
    wp_f = weight_p.reshape(N, K)
    w_f = weight.reshape(N, K)

    in_itemsize = jnp.dtype(inp.dtype).itemsize
    auto_r, auto_v = _auto_tiles(N, V, in_itemsize)
    tr = auto_r if tile_rows is None else tile_rows
    tv = auto_v if tile_v is None else tile_v
    g_rows = pl.cdiv(N, tr)
    g_v = pl.cdiv(V, tv)

    kernel = functools.partial(_lm_hard_kernel, n_rows=N, tile_rows=tr, tile_v=tv)

    cost = pl.CostEstimate(
        flops=int(N * (2 * V + 2 * K + 16)),
        transcendentals=int(N),
        bytes_accessed=int(N * V * in_itemsize
                           + 2 * N * K * jnp.dtype(weight_p.dtype).itemsize
                           + 3 * N * 4
                           + g_rows * 8 * 128 * 4),
    )

    partials = pl.pallas_call(
        kernel,
        out_shape=jax.ShapeDtypeStruct((g_rows, 8, 128), jnp.float32),
        grid_spec=pltpu.PrefetchScalarGridSpec(
            num_scalar_prefetch=0,
            grid=(g_rows, g_v),
            in_specs=[
                pl.BlockSpec((tr, tv), lambda r, v: (r, v)),
                pl.BlockSpec((tr, 1), lambda r, v: (r, 0)),
                pl.BlockSpec((tr, 1), lambda r, v: (r, 0)),
                pl.BlockSpec((tr, 1), lambda r, v: (r, 0)),
                pl.BlockSpec((tr, K), lambda r, v: (r, 0)),
                pl.BlockSpec((tr, K), lambda r, v: (r, 0)),
            ],
            out_specs=pl.BlockSpec((1, 8, 128), lambda r, v: (r, 0, 0)),
            scratch_shapes=[pltpu.VMEM((tr, 1), jnp.float32)],
        ),
        compiler_params=pltpu.CompilerParams(
            dimension_semantics=("parallel", "arbitrary"),
            vmem_limit_bytes=48 * 1024 * 1024,
        ),
        cost_estimate=cost,
    )(inp_f, tgt_f, msk_f, base_f, wp_f, w_f)

    # Finalize (tiny) in the wrapper: single negation + divides in f32.
    sums = jnp.sum(partials[:, 0, :4], axis=0)
    s_out, s_l1, s_bm, s_m = sums[0], sums[1], sums[2], sums[3]
    output = -s_out / s_m

    if same_size:
        new_b = 0.9 * (s_bm / s_m) + 0.1 * (s_l1 / s_m)
        baseline_out = jnp.full((B, T), new_b, dtype=jnp.float32)
    else:
        baseline_out = baseline
    return output, baseline_out


def _reference(inp, target, mask, baseline, weight_p, weight):
    """Plain-JAX reference mirroring the PyTorch forward."""
    B, T, V = inp.shape
    target = target[:, :T]
    mask = mask[:, :T].astype(jnp.float32)
    gathered = jnp.take_along_axis(inp, target[..., None], axis=2)[..., 0]
    loss_1 = gathered * mask
    wp_sel = jnp.sum(jnp.where(weight > 0, weight_p, 0.0), axis=2)
    coeff = loss_1 - baseline if loss_1.shape == tuple(baseline.shape) else loss_1
    loss_2 = coeff * jnp.log(wp_sel + _EPS) * mask
    output = -jnp.sum(loss_1 + loss_2) / jnp.sum(mask)
    if loss_1.shape == tuple(baseline.shape):
        pre_b = jnp.sum(loss_1) / jnp.sum(mask)
        b = jnp.sum(baseline * mask) / jnp.sum(mask)
        nb = 0.9 * b + 0.1 * pre_b
        baseline_out = jnp.full((B, T), nb, dtype=jnp.float32)
    else:
        baseline_out = baseline
    return output, baseline_out


if __name__ == "__main__":
    B, T, T_full, V, K = 16, 8, 10, 32, 4
    key = jax.random.PRNGKey(0)
    k1, k2, k3, k4, k5, k6 = jax.random.split(key, 6)

    # log-prob input over vocab
    inp = jax.nn.log_softmax(jax.random.normal(k1, (B, T, V), jnp.float32), axis=-1)
    # targets / mask carry a longer sequence dim (exercises the [:, :T] truncation)
    target = jax.random.randint(k2, (B, T_full), 0, V).astype(jnp.int32)
    lengths = jax.random.randint(k3, (B,), 3, T + 1)
    mask = (jnp.arange(T_full)[None, :] < lengths[:, None]).astype(jnp.float32)
    # baseline same shape as loss_1 -> active baseline-update branch
    baseline = 0.1 * jax.random.normal(k4, (B, T), jnp.float32) - 1.0
    # hard attention: weight one-hot over K, weight_p = attention probabilities
    att = jax.random.randint(k5, (B, T), 0, K)
    weight = jax.nn.one_hot(att, K, dtype=jnp.float32)
    weight_p = jax.nn.softmax(jax.random.normal(k6, (B, T, K), jnp.float32), axis=-1)

    out, new_baseline = language_model_criterion_hard(
        inp, target, mask, baseline, weight_p, weight)   # auto tiles: (32 rows, full V), grid (4, 1)
    out = jax.block_until_ready(out)
    new_baseline = jax.block_until_ready(new_baseline)

    ref_out, ref_baseline = _reference(inp, target, mask, baseline, weight_p, weight)
    assert jnp.allclose(out, ref_out, rtol=1e-5, atol=1e-5), (out, ref_out)
    assert jnp.allclose(new_baseline, ref_baseline, rtol=1e-5, atol=1e-5), (
        new_baseline[0, 0], ref_baseline[0, 0])

    print("KERNEL_OK")
</pallas_src>

<mosaic_0001>
module attributes {stable_mosaic.version = 11 : i64} {
  func.func @_lm_hard_kernel(%arg0: i32, %arg1: i32, %arg2: memref<32x32xf32, #tpu.memory_space<vmem>>, %arg3: memref<32x1xi32, #tpu.memory_space<vmem>>, %arg4: memref<32x1xf32, #tpu.memory_space<vmem>>, %arg5: memref<32x1xf32, #tpu.memory_space<vmem>>, %arg6: memref<32x4xf32, #tpu.memory_space<vmem>>, %arg7: memref<32x4xf32, #tpu.memory_space<vmem>>, %arg8: memref<1x8x128xf32, #tpu.memory_space<vmem>>, %arg9: memref<32x1xf32, #tpu.memory_space<vmem>>) attributes {dimension_semantics = [#tpu.dimension_semantics<parallel>, #tpu.dimension_semantics<arbitrary>], iteration_bounds = array<i64: 4, 1>, scalar_prefetch = 0 : i64, scratch_operands = 1 : i64, tpu.core_type = #tpu.core_type<tc>, window_params = [{transform_indices = @transform_0, window_bounds = array<i64: 32, 32>}, {transform_indices = @transform_1, window_bounds = array<i64: 32, 1>}, {transform_indices = @transform_2, window_bounds = array<i64: 32, 1>}, {transform_indices = @transform_3, window_bounds = array<i64: 32, 1>}, {transform_indices = @transform_4, window_bounds = array<i64: 32, 4>}, {transform_indices = @transform_5, window_bounds = array<i64: 32, 4>}, {transform_indices = @transform_6, window_bounds = array<i64: 1, 8, 128>}]} {
    %c0_i32 = arith.constant 0 : i32
    %0 = arith.cmpi eq, %arg1, %c0_i32 : i32
    %1 = arith.extui %0 : i1 to i32
    %c0_i32_0 = arith.constant 0 : i32
    %2 = arith.cmpi ne, %1, %c0_i32_0 : i32
    scf.if %2 {
      %cst_11 = arith.constant 0.000000e+00 : f32
      %22 = vector.broadcast %cst_11 : f32 to vector<32x1xf32>
      %c0_12 = arith.constant 0 : index
      %c0_13 = arith.constant 0 : index
      %23 = vector.load %arg9[%c0_12, %c0_13] : memref<32x1xf32, #tpu.memory_space<vmem>>, vector<32x1xf32>
      tpu.vector_store %arg9[%c0_12, %c0_13], %22 {strides = array<i32>} : memref<32x1xf32, #tpu.memory_space<vmem>>, vector<32x1xf32>,
    } else {
    }
    %c0 = arith.constant 0 : index
    %c0_1 = arith.constant 0 : index
    %3 = vector.load %arg2[%c0, %c0_1] : memref<32x32xf32, #tpu.memory_space<vmem>>, vector<32x32xf32>
    %c0_2 = arith.constant 0 : index
    %c0_3 = arith.constant 0 : index
    %4 = vector.load %arg3[%c0_2, %c0_3] : memref<32x1xi32, #tpu.memory_space<vmem>>, vector<32x1xi32>
    %5 = tpu.iota {dimensions = array<i32: 1>} : vector<1x32xi32>
    %c32_i32 = arith.constant 32 : i32
    %6 = arith.muli %arg1, %c32_i32 : i32
    %7 = vector.broadcast %6 : i32 to vector<1x32xi32>
    %8 = arith.addi %5, %7 : vector<1x32xi32>
    %9 = vector.broadcast %8 : vector<1x32xi32> to vector<32x32xi32>
    %10 = vector.broadcast %4 : vector<32x1xi32> to vector<32x32xi32>
    %11 = arith.cmpi eq, %9, %10 : vector<32x32xi32>
    %cst = arith.constant 0.000000e+00 : f32
    %12 = vector.broadcast %cst : f32 to vector<32x32xf32>
    %13 = arith.select %11, %3, %12 : vector<32x32xi1>, vector<32x32xf32>
    %cst_4 = arith.constant dense<0.000000e+00> : vector<32xf32>
    %14 = vector.multi_reduction <add>, %13, %cst_4 [1] : vector<32x32xf32> to vector<32xf32>
    %15 = vector.shape_cast %14 : vector<32xf32> to vector<32x1xf32>
    %c0_5 = arith.constant 0 : index
    %c0_6 = arith.constant 0 : index
    %16 = vector.load %arg9[%c0_5, %c0_6] : memref<32x1xf32, #tpu.memory_space<vmem>>, vector<32x1xf32>
    %17 = arith.addf %16, %15 : vector<32x1xf32>
    %c0_7 = arith.constant 0 : index
    %c0_8 = arith.constant 0 : index
    %18 = vector.load %arg9[%c0_7, %c0_8] : memref<32x1xf32, #tpu.memory_space<vmem>>, vector<32x1xf32>
    tpu.vector_store %arg9[%c0_7, %c0_8], %17 {strides = array<i32>} : memref<32x1xf32, #tpu.memory_space<vmem>>, vector<32x1xf32>,
    %c0_i32_9 = arith.constant 0 : i32
    %19 = arith.cmpi eq, %arg1, %c0_i32_9 : i32
    %20 = arith.extui %19 : i1 to i32
    %c0_i32_10 = arith.constant 0 : i32
    %21 = arith.cmpi ne, %20, %c0_i32_10 : i32
    scf.if %21 {
      %22 = tpu.iota {dimensions = array<i32: 0>} : vector<32x1xi32>
      %c32_i32_11 = arith.constant 32 : i32
      %23 = arith.muli %arg0, %c32_i32_11 : i32
      %24 = vector.broadcast %23 : i32 to vector<32x1xi32>
      %25 = arith.addi %22, %24 : vector<32x1xi32>
      %c128_i32 = arith.constant 128 : i32
      %26 = vector.broadcast %c128_i32 : i32 to vector<32x1xi32>
      %27 = arith.cmpi slt, %25, %26 : vector<32x1xi32>
      %c0_12 = arith.constant 0 : index
      %c0_13 = arith.constant 0 : index
      %28 = vector.load %arg4[%c0_12, %c0_13] : memref<32x1xf32, #tpu.memory_space<vmem>>, vector<32x1xf32>
      %cst_14 = arith.constant 0.000000e+00 : f32
      %29 = vector.broadcast %cst_14 : f32 to vector<32x1xf32>
      %30 = arith.select %27, %28, %29 : vector<32x1xi1>, vector<32x1xf32>
      %c0_15 = arith.constant 0 : index
      %c0_16 = arith.constant 0 : index
      %31 = vector.load %arg5[%c0_15, %c0_16] : memref<32x1xf32, #tpu.memory_space<vmem>>, vector<32x1xf32>
      %cst_17 = arith.constant 0.000000e+00 : f32
      %32 = vector.broadcast %cst_17 : f32 to vector<32x1xf32>
      %33 = arith.select %27, %31, %32 : vector<32x1xi1>, vector<32x1xf32>
      %c0_18 = arith.constant 0 : index
      %c0_19 = arith.constant 0 : index
      %34 = vector.load %arg9[%c0_18, %c0_19] : memref<32x1xf32, #tpu.memory_space<vmem>>, vector<32x1xf32>
      %cst_20 = arith.constant 0.000000e+00 : f32
      %35 = vector.broadcast %cst_20 : f32 to vector<32x1xf32>
      %36 = arith.select %27, %34, %35 : vector<32x1xi1>, vector<32x1xf32>
      %c0_21 = arith.constant 0 : index
      %c0_22 = arith.constant 0 : index
      %37 = vector.load %arg6[%c0_21, %c0_22] : memref<32x4xf32, #tpu.memory_space<vmem>>, vector<32x4xf32>
      %c0_23 = arith.constant 0 : index
      %c0_24 = arith.constant 0 : index
      %38 = vector.load %arg7[%c0_23, %c0_24] : memref<32x4xf32, #tpu.memory_space<vmem>>, vector<32x4xf32>
      %cst_25 = arith.constant 0.000000e+00 : f32
      %39 = vector.broadcast %cst_25 : f32 to vector<32x4xf32>
      %40 = arith.cmpf ogt, %38, %39 : vector<32x4xf32>
      %cst_26 = arith.constant 0.000000e+00 : f32
      %41 = vector.broadcast %cst_26 : f32 to vector<32x4xf32>
      %42 = arith.select %40, %37, %41 : vector<32x4xi1>, vector<32x4xf32>
      %cst_27 = arith.constant dense<0.000000e+00> : vector<32xf32>
      %43 = vector.multi_reduction <add>, %42, %cst_27 [1] : vector<32x4xf32> to vector<32xf32>
      %44 = vector.shape_cast %43 : vector<32xf32> to vector<32x1xf32>
      %cst_28 = arith.constant 1.000000e+00 : f32
      %45 = vector.broadcast %cst_28 : f32 to vector<32x1xf32>
      %46 = arith.select %27, %44, %45 : vector<32x1xi1>, vector<32x1xf32>
      %47 = arith.mulf %36, %30 : vector<32x1xf32>
      %48 = arith.subf %47, %33 : vector<32x1xf32>
      %cst_29 = arith.constant 9.99999993E-9 : f32
      %49 = vector.broadcast %cst_29 : f32 to vector<32x1xf32>
      %50 = arith.addf %46, %49 : vector<32x1xf32>
      %51 = math.log %50 : vector<32x1xf32>
      %52 = arith.mulf %48, %51 : vector<32x1xf32>
      %53 = arith.mulf %52, %30 : vector<32x1xf32>
      %54 = arith.addf %47, %53 : vector<32x1xf32>
      %55 = vector.shape_cast %54 : vector<32x1xf32> to vector<1x32x1xf32>
      %cst_30 = arith.constant dense<0.000000e+00> : vector<1xf32>
      %56 = vector.multi_reduction <add>, %55, %cst_30 [1, 2] : vector<1x32x1xf32> to vector<1xf32>
      %57 = vector.shape_cast %56 : vector<1xf32> to vector<1x1x1xf32>
      %58 = vector.extract %57[0, 0, 0] : f32 from vector<1x1x1xf32>
      %59 = vector.shape_cast %47 : vector<32x1xf32> to vector<1x32x1xf32>
      %cst_31 = arith.constant dense<0.000000e+00> : vector<1xf32>
      %60 = vector.multi_reduction <add>, %59, %cst_31 [1, 2] : vector<1x32x1xf32> to vector<1xf32>
      %61 = vector.shape_cast %60 : vector<1xf32> to vector<1x1x1xf32>
      %62 = vector.extract %61[0, 0, 0] : f32 from vector<1x1x1xf32>
      %63 = arith.mulf %33, %30 : vector<32x1xf32>
      %64 = vector.shape_cast %63 : vector<32x1xf32> to vector<1x32x1xf32>
      %cst_32 = arith.constant dense<0.000000e+00> : vector<1xf32>
      %65 = vector.multi_reduction <add>, %64, %cst_32 [1, 2] : vector<1x32x1xf32> to vector<1xf32>
      %66 = vector.shape_cast %65 : vector<1xf32> to vector<1x1x1xf32>
      %67 = vector.extract %66[0, 0, 0] : f32 from vector<1x1x1xf32>
      %68 = vector.shape_cast %30 : vector<32x1xf32> to vector<1x32x1xf32>
      %cst_33 = arith.constant dense<0.000000e+00> : vector<1xf32>
      %69 = vector.multi_reduction <add>, %68, %cst_33 [1, 2] : vector<1x32x1xf32> to vector<1xf32>
      %70 = vector.shape_cast %69 : vector<1xf32> to vector<1x1x1xf32>
      %71 = vector.extract %70[0, 0, 0] : f32 from vector<1x1x1xf32>
      %72 = tpu.iota {dimensions = array<i32: 1>} : vector<8x128xi32>
      %c0_i32_34 = arith.constant 0 : i32
      %73 = vector.broadcast %c0_i32_34 : i32 to vector<8x128xi32>
      %74 = arith.cmpi eq, %72, %73 : vector<8x128xi32>
      %c1_i32 = arith.constant 1 : i32
      %75 = vector.broadcast %c1_i32 : i32 to vector<8x128xi32>
      %76 = arith.cmpi eq, %72, %75 : vector<8x128xi32>
      %c2_i32 = arith.constant 2 : i32
      %77 = vector.broadcast %c2_i32 : i32 to vector<8x128xi32>
      %78 = arith.cmpi eq, %72, %77 : vector<8x128xi32>
      %c3_i32 = arith.constant 3 : i32
      %79 = vector.broadcast %c3_i32 : i32 to vector<8x128xi32>
      %80 = arith.cmpi eq, %72, %79 : vector<8x128xi32>
      %cst_35 = arith.constant 0.000000e+00 : f32
      %81 = vector.broadcast %71 : f32 to vector<8x128xf32>
      %82 = vector.broadcast %cst_35 : f32 to vector<8x128xf32>
      %83 = arith.select %80, %81, %82 : vector<8x128xi1>, vector<8x128xf32>
      %84 = vector.broadcast %67 : f32 to vector<8x128xf32>
      %85 = arith.select %78, %84, %83 : vector<8x128xi1>, vector<8x128xf32>
      %86 = vector.broadcast %62 : f32 to vector<8x128xf32>
      %87 = arith.select %76, %86, %85 : vector<8x128xi1>, vector<8x128xf32>
      %88 = vector.broadcast %58 : f32 to vector<8x128xf32>
      %89 = arith.select %74, %88, %87 : vector<8x128xi1>, vector<8x128xf32>
      %c0_36 = arith.constant 0 : index
      %c0_37 = arith.constant 0 : index
      %c0_38 = arith.constant 0 : index
      %90 = vector.load %arg8[%c0_36, %c0_37, %c0_38] : memref<1x8x128xf32, #tpu.memory_space<vmem>>, vector<1x8x128xf32>
      %91 = vector.shape_cast %90 : vector<1x8x128xf32> to vector<8x128xf32>
      %92 = vector.shape_cast %89 : vector<8x128xf32> to vector<1x8x128xf32>
      tpu.vector_store %arg8[%c0_36, %c0_37, %c0_38], %92 {strides = array<i32>} : memref<1x8x128xf32, #tpu.memory_space<vmem>>, vector<1x8x128xf32>,
    } else {
    }
    return
  }
  func.func @transform_0(%arg0: i32, %arg1: i32) -> (i32, i32) {
    %c0_i32 = arith.constant 0 : i32
    return %arg0, %arg1 : i32, i32
  }
  func.func @transform_1(%arg0: i32, %arg1: i32) -> (i32, i32) {
    %c0_i32 = arith.constant 0 : i32
    %c0_i32_0 = arith.constant 0 : i32
    return %arg0, %c0_i32 : i32, i32
  }
  func.func @transform_2(%arg0: i32, %arg1: i32) -> (i32, i32) {
    %c0_i32 = arith.constant 0 : i32
    %c0_i32_0 = arith.constant 0 : i32
    return %arg0, %c0_i32 : i32, i32
  }
  func.func @transform_3(%arg0: i32, %arg1: i32) -> (i32, i32) {
    %c0_i32 = arith.constant 0 : i32
    %c0_i32_0 = arith.constant 0 : i32
    return %arg0, %c0_i32 : i32, i32
  }
  func.func @transform_4(%arg0: i32, %arg1: i32) -> (i32, i32) {
    %c0_i32 = arith.constant 0 : i32
    %c0_i32_0 = arith.constant 0 : i32
    return %arg0, %c0_i32 : i32, i32
  }
  func.func @transform_5(%arg0: i32, %arg1: i32) -> (i32, i32) {
    %c0_i32 = arith.constant 0 : i32
    %c0_i32_0 = arith.constant 0 : i32
    return %arg0, %c0_i32 : i32, i32
  }
  func.func @transform_6(%arg0: i32, %arg1: i32) -> (i32, i32, i32) {
    %c0_i32 = arith.constant 0 : i32
    %c0_i32_0 = arith.constant 0 : i32
    %c0_i32_1 = arith.constant 0 : i32
    return %arg0, %c0_i32, %c0_i32_0 : i32, i32, i32
  }
}

</mosaic_0001>

<llo_original>
// kernel: tpu_custom_call.1
$region0: #{tpu_custom_call.1}
  #allocation0 [shape = 'u32[]', space=smem, size = 0x4, offset = 0x4, fixed_abs, tag = 'smem constant byte address 0x4 - core index']
  #allocation1 [shape = 'u32[72,128]{1,0:T(1,128)}', space=vmem, size = 0x9000, scoped, tag = 'internal scratch']
  #allocation2 [shape = 'f32[32,1]{1,0:T(8,128)}', space=vmem, size = 0x4000, scoped, tag = 'scratch operand']
  %s0 = inlined_call_operand.vmem [shape: f32[128,32], index: 0, kind: input, shape index: {}]
  %s1 = inlined_call_operand.vmem [shape: s32[128,1], index: 1, kind: input, shape index: {}]
  %s2 = inlined_call_operand.vmem [shape: f32[128,1], index: 2, kind: input, shape index: {}]
  %s3 = inlined_call_operand.vmem [shape: f32[128,1], index: 3, kind: input, shape index: {}]
  %s4 = inlined_call_operand.vmem [shape: f32[128,4], index: 4, kind: input, shape index: {}]
  %s5 = inlined_call_operand.vmem [shape: f32[128,4], index: 5, kind: input, shape index: {}]
  %s6 = inlined_call_operand.hbm [shape: f32[4,8,128], index: 6, kind: output, shape index: {}]
  %s7 = sld [smem:[#allocation0]]
  $region65: #{tpu_custom_call.1} parent=0
    _
  %s9 = ssub.s32 1, %s7
  %s10 = scalar_select 0, %s9, %s7
  $region1: #{tpu_custom_call.1} parent=0
    #allocation3 [shape = 'u8[8192]{0}', space=vmem, size = 0x2000, scoped, tag = 'output window, operand 0']
    #allocation4 [shape = 's32[2]{0}', space=sflag, size = 0x8, scoped, tag = 'scoped memory for tpu_custom_call.1']
    %11 = vsyncpa [#allocation4], 0
    %s12 = scalar_lea.sflag [#allocation4], 1
    %13 = vsyncpa %s12, 0
    loop: start=0, step=1, limit=6
    $region2: #{tpu_custom_call.1} parent=1 // loop_pre_header
      _
    $region3: #{tpu_custom_call.1} parent=1 // loop_header
      %s15 = sphi 0, %s19
      %p16 = scmp.ge.s32.totalorder %s15, 6
      %s22 = sphi 0, %s34
      %s23 = sphi 0, %s30
      %s24 = sphi 0, %s22
      %s25 = sphi 0, %s23
      %s26 = sphi 0, %s24
      %s27 = sphi 0, %s25
      %s39 = sphi 0, %s41
      %s42 = sphi 0, %s39
      %s43 = sphi 0, %s42
      %s59 = sphi 0, %s43
      %s65 = sphi 0, %s67
      %s68 = sphi 0, %s65
      %s69 = sphi 0, %s68
      %s85 = sphi 0, %s69
      %s91 = sphi 0, %s93
      %s94 = sphi 0, %s91
      %s95 = sphi 0, %s94
      %s111 = sphi 0, %s95
      %s117 = sphi 0, %s119
      %s120 = sphi 0, %s117
      %s121 = sphi 0, %s120
      %s137 = sphi 0, %s121
      %s143 = sphi 0, %s145
      %s146 = sphi 0, %s143
      %s147 = sphi 0, %s146
      %s163 = sphi 0, %s147
      %s169 = sphi 0, %s171
      %s172 = sphi 0, %s169
      %s173 = sphi 0, %s172
      %s189 = sphi 0, %s173
      %s195 = sphi 0, %s197
      %s198 = sphi 0, %s195
      %s199 = sphi 0, %s198
      %s215 = sphi 0, %s199
    $region4: #{tpu_custom_call.1} parent=1 // loop_header_branch
      %18 = sbr.rel (%p16) target = $region8
    $region5: #{tpu_custom_call.1} parent=1 // loop_body
      %s20 = ssub.s32 %s15, 1
      %s21 = ssub.s32 %s15, 2
      %s28 = sadd.s32 1, %s23
      %p29 = scmp.ge.s32.totalorder %s28, 1
      %s30 = scalar_select %p29, 0, %s28
      %s31 = sadd.s32 1, %s22
      %s32 = scalar_select %p29, %s31, %s22
      %p33 = scmp.ge.s32.totalorder %s32, 4
      %s34 = scalar_select %p33, 0, %s32
      %s35 = ssub.s32 %s22, %s34
      %s36 = ssub.s32 %s23, %s30
      %s37 = sor.u32 %s35, %s36
      %p38 = scmp.eq.s32.totalorder %s37, 0
      %s40 = sadd.s32 %s39, 1
      %s41 = scalar_select %p38, %s39, %s40
      %p44 = pneg %p38
      %p45 = scmp.eq.s32.totalorder %s15, 3
      %p46 = por %p44, %p45
      %p47 = scmp.ne.s32.totalorder %s39, %s42
      %p48 = scmp.eq.s32.totalorder %s15, 0
      %p49 = por %p47, %p48
      %p50 = scmp.ne.s32.totalorder %s39, %s42
      %p51 = scmp.eq.s32.totalorder %s20, 3
      %p52 = por %p50, %p51
      %p53 = scmp.ne.s32.totalorder %s42, %s43
      %p54 = scmp.eq.s32.totalorder %s20, 0
      %p55 = por %p53, %p54
      %p56 = scmp.ne.s32.totalorder %s42, %s43
      %p57 = scmp.eq.s32.totalorder %s21, 3
      %p58 = por %p56, %p57
      %p60 = scmp.ne.s32.totalorder %s43, %s59
      %p61 = scmp.eq.s32.totalorder %s21, 0
      %p62 = por %p60, %p61
      %s63 = ssub.s32 %s22, %s34
      %p64 = scmp.eq.s32.totalorder %s63, 0
      %s66 = sadd.s32 %s65, 1
      %s67 = scalar_select %p64, %s65, %s66
      %p70 = pneg %p64
      %p71 = scmp.eq.s32.totalorder %s15, 3
      %p72 = por %p70, %p71
      %p73 = scmp.ne.s32.totalorder %s65, %s68
      %p74 = scmp.eq.s32.totalorder %s15, 0
      %p75 = por %p73, %p74
      %p76 = scmp.ne.s32.totalorder %s65, %s68
      %p77 = scmp.eq.s32.totalorder %s20, 3
      %p78 = por %p76, %p77
      %p79 = scmp.ne.s32.totalorder %s68, %s69
      %p80 = scmp.eq.s32.totalorder %s20, 0
      %p81 = por %p79, %p80
      %p82 = scmp.ne.s32.totalorder %s68, %s69
      %p83 = scmp.eq.s32.totalorder %s21, 3
      %p84 = por %p82, %p83
      %p86 = scmp.ne.s32.totalorder %s69, %s85
      %p87 = scmp.eq.s32.totalorder %s21, 0
      %p88 = por %p86, %p87
      %s89 = ssub.s32 %s22, %s34
      %p90 = scmp.eq.s32.totalorder %s89, 0
      %s92 = sadd.s32 %s91, 1
      %s93 = scalar_select %p90, %s91, %s92
      %p96 = pneg %p90
      %p97 = scmp.eq.s32.totalorder %s15, 3
      %p98 = por %p96, %p97
      %p99 = scmp.ne.s32.totalorder %s91, %s94
      %p100 = scmp.eq.s32.totalorder %s15, 0
      %p101 = por %p99, %p100
      %p102 = scmp.ne.s32.totalorder %s91, %s94
      %p103 = scmp.eq.s32.totalorder %s20, 3
      %p104 = por %p102, %p103
      %p105 = scmp.ne.s32.totalorder %s94, %s95
      %p106 = scmp.eq.s32.totalorder %s20, 0
      %p107 = por %p105, %p106
      %p108 = scmp.ne.s32.totalorder %s94, %s95
      %p109 = scmp.eq.s32.totalorder %s21, 3
      %p110 = por %p108, %p109
      %p112 = scmp.ne.s32.totalorder %s95, %s111
      %p113 = scmp.eq.s32.totalorder %s21, 0
      %p114 = por %p112, %p113
      %s115 = ssub.s32 %s22, %s34
      %p116 = scmp.eq.s32.totalorder %s115, 0
      %s118 = sadd.s32 %s117, 1
      %s119 = scalar_select %p116, %s117, %s118
      %p122 = pneg %p116
      %p123 = scmp.eq.s32.totalorder %s15, 3
      %p124 = por %p122, %p123
      %p125 = scmp.ne.s32.totalorder %s117, %s120
      %p126 = scmp.eq.s32.totalorder %s15, 0
      %p127 = por %p125, %p126
      %p128 = scmp.ne.s32.totalorder %s117, %s120
      %p129 = scmp.eq.s32.totalorder %s20, 3
      %p130 = por %p128, %p129
      %p131 = scmp.ne.s32.totalorder %s120, %s121
      %p132 = scmp.eq.s32.totalorder %s20, 0
      %p133 = por %p131, %p132
      %p134 = scmp.ne.s32.totalorder %s120, %s121
      %p135 = scmp.eq.s32.totalorder %s21, 3
      %p136 = por %p134, %p135
      %p138 = scmp.ne.s32.totalorder %s121, %s137
      %p139 = scmp.eq.s32.totalorder %s21, 0
      %p140 = por %p138, %p139
      %s141 = ssub.s32 %s22, %s34
      %p142 = scmp.eq.s32.totalorder %s141, 0
      %s144 = sadd.s32 %s143, 1
      %s145 = scalar_select %p142, %s143, %s144
      %p148 = pneg %p142
      %p149 = scmp.eq.s32.totalorder %s15, 3
      %p150 = por %p148, %p149
      %p151 = scmp.ne.s32.totalorder %s143, %s146
      %p152 = scmp.eq.s32.totalorder %s15, 0
      %p153 = por %p151, %p152
      %p154 = scmp.ne.s32.totalorder %s143, %s146
      %p155 = scmp.eq.s32.totalorder %s20, 3
      %p156 = por %p154, %p155
      %p157 = scmp.ne.s32.totalorder %s146, %s147
      %p158 = scmp.eq.s32.totalorder %s20, 0
      %p159 = por %p157, %p158
      %p160 = scmp.ne.s32.totalorder %s146, %s147
      %p161 = scmp.eq.s32.totalorder %s21, 3
      %p162 = por %p160, %p161
      %p164 = scmp.ne.s32.totalorder %s147, %s163
      %p165 = scmp.eq.s32.totalorder %s21, 0
      %p166 = por %p164, %p165
      %s167 = ssub.s32 %s22, %s34
      %p168 = scmp.eq.s32.totalorder %s167, 0
      %s170 = sadd.s32 %s169, 1
      %s171 = scalar_select %p168, %s169, %s170
      %p174 = pneg %p168
      %p175 = scmp.eq.s32.totalorder %s15, 3
      %p176 = por %p174, %p175
      %p177 = scmp.ne.s32.totalorder %s169, %s172
      %p178 = scmp.eq.s32.totalorder %s15, 0
      %p179 = por %p177, %p178
      %p180 = scmp.ne.s32.totalorder %s169, %s172
      %p181 = scmp.eq.s32.totalorder %s20, 3
      %p182 = por %p180, %p181
      %p183 = scmp.ne.s32.totalorder %s172, %s173
      %p184 = scmp.eq.s32.totalorder %s20, 0
      %p185 = por %p183, %p184
      %p186 = scmp.ne.s32.totalorder %s172, %s173
      %p187 = scmp.eq.s32.totalorder %s21, 3
      %p188 = por %p186, %p187
      %p190 = scmp.ne.s32.totalorder %s173, %s189
      %p191 = scmp.eq.s32.totalorder %s21, 0
      %p192 = por %p190, %p191
      %s193 = ssub.s32 %s22, %s34
      %p194 = scmp.eq.s32.totalorder %s193, 0
      %s196 = sadd.s32 %s195, 1
      %s197 = scalar_select %p194, %s195, %s196
      %p200 = pneg %p194
      %p201 = scmp.eq.s32.totalorder %s15, 3
      %p202 = por %p200, %p201
      %p203 = scmp.ne.s32.totalorder %s195, %s198
      %p204 = scmp.eq.s32.totalorder %s15, 0
      %p205 = por %p203, %p204
      %p206 = scmp.ne.s32.totalorder %s195, %s198
      %p207 = scmp.eq.s32.totalorder %s20, 3
      %p208 = por %p206, %p207
      %p209 = scmp.ne.s32.totalorder %s198, %s199
      %p210 = scmp.eq.s32.totalorder %s20, 0
      %p211 = por %p209, %p210
      %p212 = scmp.ne.s32.totalorder %s198, %s199
      %p213 = scmp.eq.s32.totalorder %s21, 3
      %p214 = por %p212, %p213
      %p216 = scmp.ne.s32.totalorder %s199, %s215
      %p217 = scmp.eq.s32.totalorder %s21, 0
      %p218 = por %p216, %p217
      %p219 = scmp.le.s32.totalorder 1, %s15
      %p220 = scmp.lt.s32.totalorder %s15, 5
      %p221 = pnand %p219, %p220
      %p222 = pneg %p221
      // Predicated region
      $region9: #{tpu_custom_call.1} parent=5 // pred_check
        _
      $region10: #{tpu_custom_call.1} parent=5 // pred_check_branch
        %224 = sbr.rel (%p221) target = $region12
      $region11: #{tpu_custom_call.1} parent=5 // pred_region
        %s225 = ssub.s32 %s15, 1
      $region12: #{tpu_custom_call.1} parent=5 // pred_fallthru
        _
      %p226 = scmp.lt.s32.totalorder %s15, 4
      // Predicated region
      $region13: #{tpu_custom_call.1} parent=5 // pred_check
        %p227 = pneg %p226
      $region14: #{tpu_custom_call.1} parent=5 // pred_check_branch
        %229 = sbr.rel (%p227) target = $region16
      $region15: #{tpu_custom_call.1} parent=5 // pred_region
        // Predicated region
        $region17: #{tpu_custom_call.1} parent=15 // pred_check
          %p230 = pneg %p49
        $region18: #{tpu_custom_call.1} parent=15 // pred_check_branch
          %232 = sbr.rel (%p230) target = $region20
        $region19: #{tpu_custom_call.1} parent=15 // pred_region
          %s233 = smul.u32 4, %s22
          %p234 = scmp.lt.s32.totalorder %s233, 15
          %s235 = scalar_select %p234, %s233, 15
          %p236 = scmp.lt.s32.totalorder %s23, 0
          %s237 = scalar_select %p236, %s23, 0
          %s238 = sadd.s32 %s237, %s235
          %s239 = smul.addr %s238, 8
          %s240 = scalar_lea.vmem %s0, %s239
          %s241 = smul.u32 4, %s22
        $region20: #{tpu_custom_call.1} parent=15 // pred_fallthru
          _
        // Predicated region
        $region21: #{tpu_custom_call.1} parent=15 // pred_check
          %p242 = pneg %p75
        $region22: #{tpu_custom_call.1} parent=15 // pred_check_branch
          %244 = sbr.rel (%p242) target = $region24
        $region23: #{tpu_custom_call.1} parent=15 // pred_region
          %s245 = smul.u32 4, %s22
          %p246 = scmp.lt.s32.totalorder %s245, 15
          %s247 = scalar_select %p246, %s245, 15
          %s248 = smul.addr %s247, 8
          %s249 = scalar_lea.vmem %s1, %s248
          %s250 = smul.u32 4, %s22
        $region24: #{tpu_custom_call.1} parent=15 // pred_fallthru
          _
        // Predicated region
        $region25: #{tpu_custom_call.1} parent=15 // pred_check
          %p251 = pneg %p101
        $region26: #{tpu_custom_call.1} parent=15 // pred_check_branch
          %253 = sbr.rel (%p251) target = $region28
        $region27: #{tpu_custom_call.1} parent=15 // pred_region
          %s254 = smul.u32 4, %s22
          %p255 = scmp.lt.s32.totalorder %s254, 15
          %s256 = scalar_select %p255, %s254, 15
          %s257 = smul.addr %s256, 8
          %s258 = scalar_lea.vmem %s2, %s257
          %s259 = smul.u32 4, %s22
        $region28: #{tpu_custom_call.1} parent=15 // pred_fallthru
          _
        // Predicated region
        $region29: #{tpu_custom_call.1} parent=15 // pred_check
          %p260 = pneg %p127
        $region30: #{tpu_custom_call.1} parent=15 // pred_check_branch
          %262 = sbr.rel (%p260) target = $region32
        $region31: #{tpu_custom_call.1} parent=15 // pred_region
          %s263 = smul.u32 4, %s22
          %p264 = scmp.lt.s32.totalorder %s263, 15
          %s265 = scalar_select %p264, %s263, 15
          %s266 = smul.addr %s265, 8
          %s267 = scalar_lea.vmem %s3, %s266
          %s268 = smul.u32 4, %s22
        $region32: #{tpu_custom_call.1} parent=15 // pred_fallthru
          _
        // Predicated region
        $region33: #{tpu_custom_call.1} parent=15 // pred_check
          %p269 = pneg %p153
        $region34: #{tpu_custom_call.1} parent=15 // pred_check_branch
          %271 = sbr.rel (%p269) target = $region36
        $region35: #{tpu_custom_call.1} parent=15 // pred_region
          %s272 = smul.u32 4, %s22
          %p273 = scmp.lt.s32.totalorder %s272, 15
          %s274 = scalar_select %p273, %s272, 15
          %s275 = smul.addr %s274, 8
          %s276 = scalar_lea.vmem %s4, %s275
          %s277 = smul.u32 4, %s22
        $region36: #{tpu_custom_call.1} parent=15 // pred_fallthru
          _
        // Predicated region
        $region37: #{tpu_custom_call.1} parent=15 // pred_check
          %p278 = pneg %p179
        $region38: #{tpu_custom_call.1} parent=15 // pred_check_branch
          %280 = sbr.rel (%p278) target = $region40
        $region39: #{tpu_custom_call.1} parent=15 // pred_region
          %s281 = smul.u32 4, %s22
          %p282 = scmp.lt.s32.totalorder %s281, 15
          %s283 = scalar_select %p282, %s281, 15
          %s284 = smul.addr %s283, 8
          %s285 = scalar_lea.vmem %s5, %s284
          %s286 = smul.u32 4, %s22
        $region40: #{tpu_custom_call.1} parent=15 // pred_fallthru
          _
      $region16: #{tpu_custom_call.1} parent=5 // pred_fallthru
        _
      %p287 = scmp.le.s32.totalorder 1, %s15
      %p288 = scmp.lt.s32.totalorder %s15, 5
      %p289 = pnand %p287, %p288
      %p290 = pneg %p289
      // Predicated region
      $region41: #{tpu_custom_call.1} parent=5 // pred_check
        _
      $region42: #{tpu_custom_call.1} parent=5 // pred_check_branch
        %292 = sbr.rel (%p289) target = $region44
      $region43: #{tpu_custom_call.1} parent=5 // pred_region
        %s293 = ssub.s32 %s15, 1
        %s294 = smul.u32 4, %s24
        %p295 = scmp.lt.s32.totalorder %s294, 15
        %s296 = scalar_select %p295, %s294, 15
        %p297 = scmp.lt.s32.totalorder %s25, 0
        %s298 = scalar_select %p297, %s25, 0
        %s299 = sadd.s32 %s298, %s296
        %s300 = smul.addr %s299, 8
        %s301 = scalar_lea.vmem %s0, %s300
        %p302 = pneg %p55
        %p303 = pneg %p52
        %s304 = smul.u32 4, %s24
        %p305 = scmp.lt.s32.totalorder %s304, 15
        %s306 = scalar_select %p305, %s304, 15
        %s307 = smul.addr %s306, 8
        %s308 = scalar_lea.vmem %s1, %s307
        %p309 = pneg %p81
        %p310 = pneg %p78
        %s311 = smul.u32 4, %s24
        %p312 = scmp.lt.s32.totalorder %s311, 15
        %s313 = scalar_select %p312, %s311, 15
        %s314 = smul.addr %s313, 8
        %s315 = scalar_lea.vmem %s2, %s314
        %p316 = pneg %p107
        %p317 = pneg %p104
        %s318 = smul.u32 4, %s24
        %p319 = scmp.lt.s32.totalorder %s318, 15
        %s320 = scalar_select %p319, %s318, 15
        %s321 = smul.addr %s320, 8
        %s322 = scalar_lea.vmem %s3, %s321
        %p323 = pneg %p133
        %p324 = pneg %p130
        %s325 = smul.u32 4, %s24
        %p326 = scmp.lt.s32.totalorder %s325, 15
        %s327 = scalar_select %p326, %s325, 15
        %s328 = smul.addr %s327, 8
        %s329 = scalar_lea.vmem %s4, %s328
        %p330 = pneg %p159
        %p331 = pneg %p156
        %s332 = smul.u32 4, %s24
        %p333 = scmp.lt.s32.totalorder %s332, 15
        %s334 = scalar_select %p333, %s332, 15
        %s335 = smul.addr %s334, 8
        %s336 = scalar_lea.vmem %s5, %s335
        %p337 = pneg %p185
        %p338 = pneg %p182
        %p339 = pneg %p211
        %p340 = pneg %p208
        %s341 = sand.u32 %s198, 1
        %s342 = scalar_lea.sflag [#allocation4], %s341
        %s343 = sand.u32 %s198, 1
        %s344 = smul.addr %s343, 8
        %s345 = scalar_lea.vmem [#allocation3], %s344
        %s346 = smul.u32 4, %s24
        %p347 = scmp.lt.s32.totalorder %s346, 15
        %s348 = scalar_select %p347, %s346, 15
        %p349 = scmp.lt.s32.totalorder %s25, 0
        %s350 = scalar_select %p349, %s25, 0
        %s351 = sadd.s32 %s350, %s348
        %s352 = smul.addr %s351, 8
        %s353 = scalar_lea.vmem %s0, %s352
        %s354 = smul.u32 4, %s24
        %s355 = smul.u32 4, %s24
        %p356 = scmp.lt.s32.totalorder %s355, 15
        %s357 = scalar_select %p356, %s355, 15
        %s358 = smul.addr %s357, 8
        %s359 = scalar_lea.vmem %s1, %s358
        %s360 = smul.u32 4, %s24
        %s361 = smul.u32 4, %s24
        %p362 = scmp.lt.s32.totalorder %s361, 15
        %s363 = scalar_select %p362, %s361, 15
        %s364 = smul.addr %s363, 8
        %s365 = scalar_lea.vmem %s2, %s364
        %s366 = smul.u32 4, %s24
        %s367 = smul.u32 4, %s24
        %p368 = scmp.lt.s32.totalorder %s367, 15
        %s369 = scalar_select %p368, %s367, 15
        %s370 = smul.addr %s369, 8
        %s371 = scalar_lea.vmem %s3, %s370
        %s372 = smul.u32 4, %s24
        %s373 = smul.u32 4, %s24
        %p374 = scmp.lt.s32.totalorder %s373, 15
        %s375 = scalar_select %p374, %s373, 15
        %s376 = smul.addr %s375, 8
        %s377 = scalar_lea.vmem %s4, %s376
        %s378 = smul.u32 4, %s24
        %s379 = smul.u32 4, %s24
        %p380 = scmp.lt.s32.totalorder %s379, 15
        %s381 = scalar_select %p380, %s379, 15
        %s382 = smul.addr %s381, 8
        %s383 = scalar_lea.vmem %s5, %s382
        %s384 = smul.u32 4, %s24
        %p385 = scmp.eq.s32.totalorder %s25, 0
        // Predicated region
        $region45: #{tpu_custom_call.1} parent=43 // pred_check
          %p386 = pneg %p385
        $region46: #{tpu_custom_call.1} parent=43 // pred_check_branch
          %388 = sbr.rel (%p386) target = $region48
        $region47: #{tpu_custom_call.1} parent=43 // pred_region
          %vm389 = vcmask 7168
          %390 = vst.msk [vmem:[#allocation2] sm:$0xff] %vm389, 0.0
          %391 = vst.msk [vmem:[#allocation2 + $0x8] sm:$0xff] %vm389, 0.0
          %392 = vst.msk [vmem:[#allocation2 + $0x10] sm:$0xff] %vm389, 0.0
          %393 = vst.msk [vmem:[#allocation2 + $0x18] sm:$0xff] %vm389, 0.0
        $region48: #{tpu_custom_call.1} parent=43 // pred_fallthru
          _
        %v394 = vld [vmem:[%s353] sm:$0xff]
        %v395 = vld [vmem:[%s353 + $0x8] sm:$0xff]
        %v396 = vld [vmem:[%s353 + $0x10] sm:$0xff]
        %v397 = vld [vmem:[%s353 + $0x18] sm:$0xff]
        %v398 = vld [vmem:[%s359] sm:$0xff]
        %v399 = vld [vmem:[%s359 + $0x8] sm:$0xff]
        %v400 = vld [vmem:[%s359 + $0x10] sm:$0xff]
        %v401 = vld [vmem:[%s359 + $0x18] sm:$0xff]
        %v402 = vlaneseq
        %v403 = vand.u32 %v402, 127
        %s404 = smul.u32 %s25, 32
        %v405 = vstv %s404
        %v406 = vadd.s32 %v403, %v405
        %407 = vset.pattern.permute.xlu0 0
        %408 = vperm.xlu0 %407, %v398
        %v409 = vpop.permute.xlu0 %408
        %410 = vset.pattern.permute.xlu0 0
        %411 = vperm.xlu0 %410, %v399
        %v412 = vpop.permute.xlu0 %411
        %413 = vset.pattern.permute.xlu0 0
        %414 = vperm.xlu0 %413, %v400
        %v415 = vpop.permute.xlu0 %414
        %416 = vset.pattern.permute.xlu0 0
        %417 = vperm.xlu0 %416, %v401
        %v418 = vpop.permute.xlu0 %417
        %vm419 = vcmp.eq.s32.totalorder %v406, %v409
        %vm420 = vcmp.eq.s32.totalorder %v406, %v412
        %vm421 = vcmp.eq.s32.totalorder %v406, %v415
        %vm422 = vcmp.eq.s32.totalorder %v406, %v418
        %v423 = vsel %vm419, %v394, 0.0
        %v424 = vsel %vm420, %v395, 0.0
        %v425 = vsel %vm421, %v396, 0.0
        %v426 = vsel %vm422, %v397, 0.0
        %vm427 = vcmask 261120
        %v428 = vsel %vm427, %v423, 0.0
        %429 = vadd.xlane.f32.xlu0 %v428
        %v430 = vpop.xlane.xlu0 %429
        %v431 = vsel %vm427, %v424, 0.0
        %432 = vadd.xlane.f32.xlu0 %v431
        %v433 = vpop.xlane.xlu0 %432
        %v434 = vsel %vm427, %v425, 0.0
        %435 = vadd.xlane.f32.xlu0 %v434
        %v436 = vpop.xlane.xlu0 %435
        %v437 = vsel %vm427, %v426, 0.0
        %438 = vadd.xlane.f32.xlu0 %v437
        %v439 = vpop.xlane.xlu0 %438
        %v440 = vld [vmem:[#allocation2] sm:$0xff]
        %v441 = vld [vmem:[#allocation2 + $0x8] sm:$0xff]
        %v442 = vld [vmem:[#allocation2 + $0x10] sm:$0xff]
        %v443 = vld [vmem:[#allocation2 + $0x18] sm:$0xff]
        %v444 = vadd.f32 %v440, %v430
        %v445 = vadd.f32 %v441, %v433
        %v446 = vadd.f32 %v442, %v436
        %v447 = vadd.f32 %v443, %v439
        %vm448 = vcmask 7168
        %449 = vst.msk [vmem:[#allocation2] sm:$0xff] %vm448, %v444
        %450 = vst.msk [vmem:[#allocation2 + $0x8] sm:$0xff] %vm448, %v445
        %451 = vst.msk [vmem:[#allocation2 + $0x10] sm:$0xff] %vm448, %v446
        %452 = vst.msk [vmem:[#allocation2 + $0x18] sm:$0xff] %vm448, %v447
        // Predicated region
        $region49: #{tpu_custom_call.1} parent=43 // pred_check
          %p453 = pneg %p385
        $region50: #{tpu_custom_call.1} parent=43 // pred_check_branch
          %455 = sbr.rel (%p453) target = $region52
        $region51: #{tpu_custom_call.1} parent=43 // pred_region
          %v456 = vlaneseq
          %v457 = vshrl.u32 %v456, 7
          %v458 = vadd.s32 %v457, 8
          %v459 = vadd.s32 %v457, 16
          %v460 = vadd.s32 %v457, 24
          %s461 = smul.u32 %s24, 32
          %v462 = vstv %s461
          %v463 = vadd.s32 %v457, %v462
          %v464 = vadd.s32 %v458, %v462
          %v465 = vadd.s32 %v459, %v462
          %v466 = vadd.s32 %v460, %v462
          %vm467 = vcmp.lt.s32.totalorder %v463, 128
          %vm468 = vcmp.lt.s32.totalorder %v464, 128
          %vm469 = vcmp.lt.s32.totalorder %v465, 128
          %vm470 = vcmp.lt.s32.totalorder %v466, 128
          %v471 = vld [vmem:[%s365] sm:$0xff]
          %v472 = vld [vmem:[%s365 + $0x8] sm:$0xff]
          %v473 = vld [vmem:[%s365 + $0x10] sm:$0xff]
          %v474 = vld [vmem:[%s365 + $0x18] sm:$0xff]
          %v475 = vsel %vm467, %v471, 0.0
          %v476 = vsel %vm468, %v472, 0.0
          %v477 = vsel %vm469, %v473, 0.0
          %v478 = vsel %vm470, %v474, 0.0
          %v479 = vld [vmem:[%s371] sm:$0xff]
          %v480 = vld [vmem:[%s371 + $0x8] sm:$0xff]
          %v481 = vld [vmem:[%s371 + $0x10] sm:$0xff]
          %v482 = vld [vmem:[%s371 + $0x18] sm:$0xff]
          %v483 = vsel %vm467, %v479, 0.0
          %v484 = vsel %vm468, %v480, 0.0
          %v485 = vsel %vm469, %v481, 0.0
          %v486 = vsel %vm470, %v482, 0.0
          %v487 = vld [vmem:[#allocation2] sm:$0xff]
          %v488 = vld [vmem:[#allocation2 + $0x8] sm:$0xff]
          %v489 = vld [vmem:[#allocation2 + $0x10] sm:$0xff]
          %v490 = vld [vmem:[#allocation2 + $0x18] sm:$0xff]
          %v491 = vsel %vm467, %v487, 0.0
          %v492 = vsel %vm468, %v488, 0.0
          %v493 = vsel %vm469, %v489, 0.0
          %v494 = vsel %vm470, %v490, 0.0
          %v495 = vld [vmem:[%s377] sm:$0xff]
          %v496 = vld [vmem:[%s377 + $0x8] sm:$0xff]
          %v497 = vld [vmem:[%s377 + $0x10] sm:$0xff]
          %v498 = vld [vmem:[%s377 + $0x18] sm:$0xff]
          %v499 = vld [vmem:[%s383] sm:$0xff]
          %v500 = vld [vmem:[%s383 + $0x8] sm:$0xff]
          %v501 = vld [vmem:[%s383 + $0x10] sm:$0xff]
          %v502 = vld [vmem:[%s383 + $0x18] sm:$0xff]
          %vm503 = vcmp.gt.f32.partialorder %v499, 0.0
          %vm504 = vcmp.gt.f32.partialorder %v500, 0.0
          %vm505 = vcmp.gt.f32.partialorder %v501, 0.0
          %vm506 = vcmp.gt.f32.partialorder %v502, 0.0
          %v507 = vsel %vm503, %v495, 0.0
          %v508 = vsel %vm504, %v496, 0.0
          %v509 = vsel %vm505, %v497, 0.0
          %v510 = vsel %vm506, %v498, 0.0
          %vm511 = vcmask 31744
          %v512 = vsel %vm511, %v507, 0.0
          %513 = vadd.xlane.f32.xlu0 %v512
          %v514 = vpop.xlane.xlu0 %513
          %v515 = vsel %vm511, %v508, 0.0
          %516 = vadd.xlane.f32.xlu0 %v515
          %v517 = vpop.xlane.xlu0 %516
          %v518 = vsel %vm511, %v509, 0.0
          %519 = vadd.xlane.f32.xlu0 %v518
          %v520 = vpop.xlane.xlu0 %519
          %v521 = vsel %vm511, %v510, 0.0
          %522 = vadd.xlane.f32.xlu0 %v521
          %v523 = vpop.xlane.xlu0 %522
          %v524 = vsel %vm467, %v514, 1.0
          %v525 = vsel %vm468, %v517, 1.0
          %v526 = vsel %vm469, %v520, 1.0
          %v527 = vsel %vm470, %v523, 1.0
          %v528 = vmul.f32 %v491, %v475
          %v529 = vmul.f32 %v492, %v476
          %v530 = vmul.f32 %v493, %v477
          %v531 = vmul.f32 %v494, %v478
          %v532 = vsub.f32 %v528, %v483
          %v533 = vsub.f32 %v529, %v484
          %v534 = vsub.f32 %v530, %v485
          %v535 = vsub.f32 %v531, %v486
          %v536 = vadd.f32 %v524, 1e-08
          %v537 = vadd.f32 %v525, 1e-08
          %v538 = vadd.f32 %v526, 1e-08
          %v539 = vadd.f32 %v527, 1e-08
          %v540 = vlog2.pop %v536
          %v541 = vmul.f32 %v540, 0.6931472
          %v542 = vlog2.pop %v537
          %v543 = vmul.f32 %v542, 0.6931472
          %v544 = vlog2.pop %v538
          %v545 = vmul.f32 %v544, 0.6931472
          %v546 = vlog2.pop %v539
          %v547 = vmul.f32 %v546, 0.6931472
          %v548 = vmul.f32 %v532, %v541
          %v549 = vmul.f32 %v533, %v543
          %v550 = vmul.f32 %v534, %v545
          %v551 = vmul.f32 %v535, %v547
          %v552 = vmul.f32 %v548, %v475
          %v553 = vmul.f32 %v549, %v476
          %v554 = vmul.f32 %v550, %v477
          %v555 = vmul.f32 %v551, %v478
          %v556 = vadd.f32 %v528, %v552
          %v557 = vadd.f32 %v529, %v553
          %v558 = vadd.f32 %v530, %v554
          %v559 = vadd.f32 %v531, %v555
          %v560 = vsel %vm448, %v556, 0.0
          %v561 = vsel %vm448, %v557, 0.0
          %v562 = vadd.f32 %v560, %v561
          %v563 = vsel %vm448, %v558, 0.0
          %v564 = vadd.f32 %v562, %v563
          %v565 = vsel %vm448, %v559, 0.0
          %v566 = vadd.f32 %v564, %v565
          %567 = vadd.xlane.f32.xlu0 %v566
          %v568 = vpop.xlane.xlu0 %567
          %v569 = vrot.slane %v568, 4
          %v570 = vadd.f32 %v568, %v569
          %v571 = vrot.slane %v570, 2
          %v572 = vadd.f32 %v570, %v571
          %v573 = vrot.slane %v572, 1
          %v574 = vadd.f32 %v572, %v573
          %s575 = vtos %v574
          %v576 = vsel %vm448, %v528, 0.0
          %v577 = vsel %vm448, %v529, 0.0
          %v578 = vadd.f32 %v576, %v577
          %v579 = vsel %vm448, %v530, 0.0
          %v580 = vadd.f32 %v578, %v579
          %v581 = vsel %vm448, %v531, 0.0
          %v582 = vadd.f32 %v580, %v581
          %583 = vadd.xlane.f32.xlu0 %v582
          %v584 = vpop.xlane.xlu0 %583
          %v585 = vrot.slane %v584, 4
          %v586 = vadd.f32 %v584, %v585
          %v587 = vrot.slane %v586, 2
          %v588 = vadd.f32 %v586, %v587
          %v589 = vrot.slane %v588, 1
          %v590 = vadd.f32 %v588, %v589
          %s591 = vtos %v590
          %v592 = vmul.f32 %v483, %v475
          %v593 = vmul.f32 %v484, %v476
          %v594 = vmul.f32 %v485, %v477
          %v595 = vmul.f32 %v486, %v478
          %v596 = vsel %vm448, %v592, 0.0
          %v597 = vsel %vm448, %v593, 0.0
          %v598 = vadd.f32 %v596, %v597
          %v599 = vsel %vm448, %v594, 0.0
          %v600 = vadd.f32 %v598, %v599
          %v601 = vsel %vm448, %v595, 0.0
          %v602 = vadd.f32 %v600, %v601
          %603 = vadd.xlane.f32.xlu0 %v602
          %v604 = vpop.xlane.xlu0 %603
          %v605 = vrot.slane %v604, 4
          %v606 = vadd.f32 %v604, %v605
          %v607 = vrot.slane %v606, 2
          %v608 = vadd.f32 %v606, %v607
          %v609 = vrot.slane %v608, 1
          %v610 = vadd.f32 %v608, %v609
          %s611 = vtos %v610
          %v612 = vsel %vm448, %v475, 0.0
          %v613 = vsel %vm448, %v476, 0.0
          %v614 = vadd.f32 %v612, %v613
          %v615 = vsel %vm448, %v477, 0.0
          %v616 = vadd.f32 %v614, %v615
          %v617 = vsel %vm448, %v478, 0.0
          %v618 = vadd.f32 %v616, %v617
          %619 = vadd.xlane.f32.xlu0 %v618
          %v620 = vpop.xlane.xlu0 %619
          %v621 = vrot.slane %v620, 4
          %v622 = vadd.f32 %v620, %v621
          %v623 = vrot.slane %v622, 2
          %v624 = vadd.f32 %v622, %v623
          %v625 = vrot.slane %v624, 1
          %v626 = vadd.f32 %v624, %v625
          %s627 = vtos %v626
          %vm628 = vcmp.eq.s32.totalorder %v403, 0
          %vm629 = vcmp.eq.s32.totalorder %v403, 1
          %vm630 = vcmp.eq.s32.totalorder %v403, 2
          %vm631 = vcmp.eq.s32.totalorder %v403, 3
          %v632 = vstv %s627
          %v633 = vsel %vm631, %v632, 0.0
          %v634 = vstv %s611
          %v635 = vsel %vm630, %v634, %v633
          %v636 = vstv %s591
          %v637 = vsel %vm629, %v636, %v635
          %v638 = vstv %s575
          %v639 = vsel %vm628, %v638, %v637
          %640 = vst [vmem:[%s345] sm:$0xff] %v639
        $region52: #{tpu_custom_call.1} parent=43 // pred_fallthru
          _
        %s641 = sand.u32 %s198, 1
        %s642 = scalar_lea.sflag [#allocation4], %s641
        %s643 = sand.u32 %s198, 1
        %s644 = smul.addr %s643, 8
        %s645 = scalar_lea.vmem [#allocation3], %s644
        // Predicated region
        $region53: #{tpu_custom_call.1} parent=43 // pred_check
          %p646 = pneg %p208
        $region54: #{tpu_custom_call.1} parent=43 // pred_check_branch
          %648 = sbr.rel (%p646) target = $region56
        $region55: #{tpu_custom_call.1} parent=43 // pred_region
          %650 = vsyncadd %s642, 0
          %s651 = smul.addr %s24, 8
          %s652 = scalar_lea.hbm %s6, %s651
          %s654 = sshll.u32 %s645, 4
          %s655 = int_to_ptr.vmem [resolvable:$true] %s654
          %s656 = sshll.u32 %s652, 4
          %s657 = int_to_ptr.hbm [resolvable:$true] %s656
          %659 = dma.vmem_to_hbm [thread:$0]  %s655, 128, %s657, %s642
        $region56: #{tpu_custom_call.1} parent=43 // pred_fallthru
          _
      $region44: #{tpu_custom_call.1} parent=5 // pred_fallthru
        _
      %p660 = scmp.le.s32.totalorder 2, %s15
      // Predicated region
      $region57: #{tpu_custom_call.1} parent=5 // pred_check
        %p661 = pneg %p660
      $region58: #{tpu_custom_call.1} parent=5 // pred_check_branch
        %663 = sbr.rel (%p661) target = $region60
      $region59: #{tpu_custom_call.1} parent=5 // pred_region
        %s664 = ssub.s32 %s15, 2
        // Predicated region
        $region61: #{tpu_custom_call.1} parent=59 // pred_check
          %p665 = pneg %p214
        $region62: #{tpu_custom_call.1} parent=59 // pred_check_branch
          %667 = sbr.rel (%p665) target = $region64
        $region63: #{tpu_custom_call.1} parent=59 // pred_region
          %s668 = sand.u32 %s199, 1
          %s669 = scalar_lea.sflag [#allocation4], %s668
          %s670 = sand.u32 %s199, 1
          %s671 = smul.addr %s670, 8
          %s672 = scalar_lea.vmem [#allocation3], %s671
          %674 = dma.done %s669, 128
        $region64: #{tpu_custom_call.1} parent=59 // pred_fallthru
          _
      $region60: #{tpu_custom_call.1} parent=5 // pred_fallthru
        _
    $region6: #{tpu_custom_call.1} parent=1 // loop_footer
      %s19 = sadd.s32 1, %s15
    $region7: #{tpu_custom_call.1} parent=1 // loop_footer_branch
      %14 = sbr.rel target = $region3
    $region8: #{tpu_custom_call.1} parent=1 // loop_exit
      _
    %675 = vsyncpa [#allocation4], 1
    %s676 = scalar_lea.sflag [#allocation4], 1
    %677 = vsyncpa %s676, 1

</llo_original>
